<compile_context>
chip_gen: v6e
topology: v6e:2x2x1
jax: 0.10.0
libtpu: 0.0.40
codegen_flags: <defaults>
</compile_context>

<pallas_src>
import jax
import jax.numpy as jnp
from jax.experimental import pallas as pl
from jax.experimental.pallas import tpu as pltpu

DIM_IN = 3
DIM_OUT = 7
DEFAULT_BLOCK_ROWS = 1024


def _round_up(x: int, m: int) -> int:
    return ((x + m - 1) // m) * m


def _linear_kernel(x_ref, wt_ref, b_ref, o_ref):
    # x_ref:  (tile, DIM_IN)       f32
    # wt_ref: (DIM_IN, DIM_OUT)    f32  (W^T, PyTorch weight transposed once at init)
    # b_ref:  (1, DIM_OUT)         f32
    # o_ref:  (tile, DIM_OUT)      f32
    acc = jnp.dot(x_ref[...], wt_ref[...], preferred_element_type=jnp.float32)
    o_ref[...] = (acc + b_ref[...].astype(jnp.float32)).astype(o_ref.dtype)


def _linear_forward(x, wt, b2, *, block_rows=DEFAULT_BLOCK_ROWS):
    n = x.shape[0]
    # Row tile: multiple of 8 (sublane), capped at block_rows.
    tile = min(block_rows, _round_up(max(n, 1), 8))
    n_pad = _round_up(n, tile)
    x_p = x if n_pad == n else jnp.pad(x, ((0, n_pad - n), (0, 0)))

    out = pl.pallas_call(
        _linear_kernel,
        out_shape=jax.ShapeDtypeStruct((n_pad, DIM_OUT), x.dtype),
        grid=(n_pad // tile,),
        in_specs=[
            pl.BlockSpec((tile, DIM_IN), lambda i: (i, 0)),
            pl.BlockSpec((DIM_IN, DIM_OUT), lambda i: (0, 0)),
            pl.BlockSpec((1, DIM_OUT), lambda i: (0, 0)),
        ],
        out_specs=pl.BlockSpec((tile, DIM_OUT), lambda i: (i, 0)),
        compiler_params=pltpu.CompilerParams(
            dimension_semantics=("parallel",),
            vmem_limit_bytes=8 * 1024 * 1024,
        ),
    )(x_p, wt, b2)

    return out if n_pad == n else out[:n]


def make_linear(w, b, *, block_rows=DEFAULT_BLOCK_ROWS):
    """Prepare parameters once (PyTorch layout: w (DIM_OUT, DIM_IN), b (DIM_OUT,))
    and return a jitted forward(x) for x of shape (N, DIM_IN)."""
    wt = jnp.asarray(w).T.astype(jnp.float32)          # (DIM_IN, DIM_OUT)
    b2 = jnp.asarray(b).reshape(1, DIM_OUT).astype(jnp.float32)

    @jax.jit
    def forward(x):
        return _linear_forward(x, wt, b2, block_rows=block_rows)

    return forward


if __name__ == "__main__":
    key = jax.random.PRNGKey(0)
    k_x, k_w, k_b, k_x2 = jax.random.split(key, 4)

    # Deterministic parameter init (mimics torch.nn.Linear uniform init bounds).
    bound = 1.0 / (DIM_IN ** 0.5)
    w = jax.random.uniform(k_w, (DIM_OUT, DIM_IN), jnp.float32, -bound, bound)
    b = jax.random.uniform(k_b, (DIM_OUT,), jnp.float32, -bound, bound)

    forward = make_linear(w, b)

    # Small example batch (divisible by 8) and a ragged batch (exercises padding).
    x = jax.random.normal(k_x, (8, DIM_IN), jnp.float32)
    x2 = jax.random.normal(k_x2, (20, DIM_IN), jnp.float32)

    out = forward(x)
    out2 = forward(x2)
    jax.block_until_ready((out, out2))

    # Reference check against plain JAX.
    ref = x @ w.T + b
    ref2 = x2 @ w.T + b
    assert out.shape == (8, DIM_OUT)
    assert out2.shape == (20, DIM_OUT)
    assert jnp.allclose(out, ref, atol=1e-5, rtol=1e-5)
    assert jnp.allclose(out2, ref2, atol=1e-5, rtol=1e-5)
    print("KERNEL_OK")
</pallas_src>

<mosaic_0001>
module attributes {stable_mosaic.version = 11 : i64} {
  func.func @_linear_kernel(%arg0: i32, %arg1: memref<8x3xf32, #tpu.memory_space<vmem>>, %arg2: memref<3x7xf32, #tpu.memory_space<vmem>>, %arg3: memref<1x7xf32, #tpu.memory_space<vmem>>, %arg4: memref<8x7xf32, #tpu.memory_space<vmem>>) attributes {dimension_semantics = [#tpu.dimension_semantics<parallel>], iteration_bounds = array<i64: 1>, scalar_prefetch = 0 : i64, scratch_operands = 0 : i64, tpu.core_type = #tpu.core_type<tc>, window_params = [{transform_indices = @transform_0, window_bounds = array<i64: 8, 3>}, {pipeline_mode = #tpu.pipeline_mode<synchronous>, transform_indices = @transform_1, window_bounds = array<i64: 3, 7>}, {pipeline_mode = #tpu.pipeline_mode<synchronous>, transform_indices = @transform_2, window_bounds = array<i64: 1, 7>}, {transform_indices = @transform_3, window_bounds = array<i64: 8, 7>}]} {
    %c0 = arith.constant 0 : index
    %c0_0 = arith.constant 0 : index
    %0 = vector.load %arg1[%c0, %c0_0] : memref<8x3xf32, #tpu.memory_space<vmem>>, vector<8x3xf32>
    %c0_1 = arith.constant 0 : index
    %c0_2 = arith.constant 0 : index
    %1 = vector.load %arg2[%c0_1, %c0_2] : memref<3x7xf32, #tpu.memory_space<vmem>>, vector<3x7xf32>
    %cst = arith.constant dense<0.000000e+00> : vector<8x7xf32>
    %2 = tpu.matmul %0, %1, %cst {dimension_numbers = #tpu.dot_dimension_numbers<[1], [0], [0], [1], [0, 0, 1, 1], [], []>} : vector<8x3xf32>, vector<3x7xf32>, vector<8x7xf32> -> vector<8x7xf32>
    %c0_3 = arith.constant 0 : index
    %c0_4 = arith.constant 0 : index
    %3 = vector.load %arg3[%c0_3, %c0_4] : memref<1x7xf32, #tpu.memory_space<vmem>>, vector<1x7xf32>
    %4 = vector.broadcast %3 : vector<1x7xf32> to vector<8x7xf32>
    %5 = arith.addf %2, %4 : vector<8x7xf32>
    %c0_5 = arith.constant 0 : index
    %c0_6 = arith.constant 0 : index
    %6 = vector.load %arg4[%c0_5, %c0_6] : memref<8x7xf32, #tpu.memory_space<vmem>>, vector<8x7xf32>
    tpu.vector_store %arg4[%c0_5, %c0_6], %5 {strides = array<i32>} : memref<8x7xf32, #tpu.memory_space<vmem>>, vector<8x7xf32>,
    return
  }
  func.func @transform_0(%arg0: i32) -> (i32, i32) {
    %c0_i32 = arith.constant 0 : i32
    %c0_i32_0 = arith.constant 0 : i32
    return %arg0, %c0_i32 : i32, i32
  }
  func.func @transform_1(%arg0: i32) -> (i32, i32) {
    %c0_i32 = arith.constant 0 : i32
    %c0_i32_0 = arith.constant 0 : i32
    %c0_i32_1 = arith.constant 0 : i32
    return %c0_i32, %c0_i32_0 : i32, i32
  }
  func.func @transform_2(%arg0: i32) -> (i32, i32) {
    %c0_i32 = arith.constant 0 : i32
    %c0_i32_0 = arith.constant 0 : i32
    %c0_i32_1 = arith.constant 0 : i32
    return %c0_i32, %c0_i32_0 : i32, i32
  }
  func.func @transform_3(%arg0: i32) -> (i32, i32) {
    %c0_i32 = arith.constant 0 : i32
    %c0_i32_0 = arith.constant 0 : i32
    return %arg0, %c0_i32 : i32, i32
  }
}

</mosaic_0001>

<llo_original>
// kernel: forward.1
$region0: #{forward.1}
  #allocation0 [shape = 'u32[]', space=smem, size = 0x4, offset = 0x4, fixed_abs, tag = 'smem constant byte address 0x4 - core index']
  #allocation1 [shape = 'u32[144,128]{1,0:T(1,128)}', space=vmem, size = 0x12000, scoped, tag = 'internal scratch']
  %s0 = inlined_call_operand.vmem [shape: f32[8,3], index: 0, kind: input, shape index: {}]
  %s1 = inlined_call_operand.vmem [shape: f32[3,7], index: 1, kind: input, shape index: {}]
  %s2 = inlined_call_operand.vmem [shape: f32[1,7], index: 2, kind: input, shape index: {}]
  %s3 = inlined_call_operand.hbm [shape: f32[8,7], index: 3, kind: output, shape index: {}]
  %s4 = sld [smem:[#allocation0]]
  $region22: #{forward.1} parent=0
    _
  %s6 = ssub.s32 1, %s4
  %s7 = scalar_select 0, %s6, %s4
  $region1: #{forward.1} parent=0
    #allocation2 [shape = 'u8[4096]{0}', space=vmem, size = 0x1000, scoped, tag = 'output window, operand 0, single buffered']
    #allocation3 [shape = 's32[1]{0}', space=sflag, size = 0x4, scoped, tag = 'scoped memory for forward.1']
    %8 = vsyncpa [#allocation3], 0
    // Predicated region
    $region2: #{forward.1} parent=1 // pred_check
      _
    $region3: #{forward.1} parent=1 // pred_check_branch
      %10 = sbr.rel (0) target = $region5
    $region4: #{forward.1} parent=1 // pred_region
      _
    $region5: #{forward.1} parent=1 // pred_fallthru
      _
    // Predicated region
    $region6: #{forward.1} parent=1 // pred_check
      _
    $region7: #{forward.1} parent=1 // pred_check_branch
      %12 = sbr.rel (0) target = $region9
    $region8: #{forward.1} parent=1 // pred_region
      _
    $region9: #{forward.1} parent=1 // pred_fallthru
      _
    // Predicated region
    $region10: #{forward.1} parent=1 // pred_check
      _
    $region11: #{forward.1} parent=1 // pred_check_branch
      %14 = sbr.rel (0) target = $region13
    $region12: #{forward.1} parent=1 // pred_region
      _
    $region13: #{forward.1} parent=1 // pred_fallthru
      _
    %v15 = vld [vmem:[%s0] sm:$0xff]
    %v16 = vld [vmem:[%s1] sm:$0x7]
    %v17 = vld [vmem:[%s2] sm:$0x1]
    %v19 = vlaneseq
    %v20 = vshrl.u32 %v19, 7
    %v21 = vsub.s32 0, %v20
    %v22 = vrot.slane %v17, %v21
    %vm24 = vcmask 23552
    %v26 = vsel %vm24, %v15, 0
    %vm28 = vcmask 1042432
    %v30 = vsel %vm28, %v16, 0
    %32 = vmatprep.subr.mxu0 0.0
    %33 = vmatpush1.msra.mxu0 0.0
    %34 = vmatprep.subr.mxu0 0.0
    %35 = vmatpush1.msra.mxu0 0.0
    %36 = vmatprep.subr.mxu0 0.0
    %37 = vmatpush1.msra.mxu0 0.0
    %38 = vmatprep.subr.mxu0 0.0
    %39 = vmatpush1.msra.mxu0 0.0
    %40 = vmatprep.subr.mxu0 0.0
    %41 = vmatpush1.msra.mxu0 0.0
    %42 = vmatprep.subr.mxu0 0.0
    %43 = vmatpush1.msra.mxu0 0.0
    %44 = vmatprep.subr.mxu0 0.0
    %45 = vmatpush1.msra.mxu0 0.0
    %46 = vmatprep.subr.mxu0 0.0
    %47 = vmatpush1.msra.mxu0 0.0
    %48 = vmatprep.subr.mxu0 0.0
    %49 = vmatpush1.msra.mxu0 0.0
    %50 = vmatprep.subr.mxu0 0.0
    %51 = vmatpush1.msra.mxu0 0.0
    %52 = vmatprep.subr.mxu0 0.0
    %53 = vmatpush1.msra.mxu0 0.0
    %54 = vmatprep.subr.mxu0 0.0
    %55 = vmatpush1.msra.mxu0 0.0
    %56 = vmatprep.subr.mxu0 0.0
    %57 = vmatpush1.msra.mxu0 0.0
    %58 = vmatprep.subr.mxu0 0.0
    %59 = vmatpush1.msra.mxu0 0.0
    %60 = vmatprep.subr.mxu0 0.0
    %61 = vmatpush1.msra.mxu0 0.0
    %62 = vmatprep.subr.mxu0 0.0
    %63 = vmatpush1.msra.mxu0 %v30
    %64 = vmatprep.subr.mxu0 0.0
    %65 = vmatpush2.msra.mxu0 0.0
    %66 = vmatprep.subr.mxu0 0.0
    %67 = vmatpush2.msra.mxu0 0.0
    %68 = vmatprep.subr.mxu0 0.0
    %69 = vmatpush2.msra.mxu0 0.0
    %70 = vmatprep.subr.mxu0 0.0
    %71 = vmatpush2.msra.mxu0 0.0
    %72 = vmatprep.subr.mxu0 0.0
    %73 = vmatpush2.msra.mxu0 0.0
    %74 = vmatprep.subr.mxu0 0.0
    %75 = vmatpush2.msra.mxu0 0.0
    %76 = vmatprep.subr.mxu0 0.0
    %77 = vmatpush2.msra.mxu0 0.0
    %78 = vmatprep.subr.mxu0 0.0
    %79 = vmatpush2.msra.mxu0 0.0
    %80 = vmatprep.subr.mxu0 0.0
    %81 = vmatpush2.msra.mxu0 0.0
    %82 = vmatprep.subr.mxu0 0.0
    %83 = vmatpush2.msra.mxu0 0.0
    %84 = vmatprep.subr.mxu0 0.0
    %85 = vmatpush2.msra.mxu0 0.0
    %86 = vmatprep.subr.mxu0 0.0
    %87 = vmatpush2.msra.mxu0 0.0
    %88 = vmatprep.subr.mxu0 0.0
    %89 = vmatpush2.msra.mxu0 0.0
    %90 = vmatprep.subr.mxu0 0.0
    %91 = vmatpush2.msra.mxu0 0.0
    %92 = vmatprep.subr.mxu0 0.0
    %93 = vmatpush2.msra.mxu0 0.0
    %94 = vmatprep.subr.mxu0 0.0
    %95 = vmatpush2.msra.mxu0 0.0
    %96 = vmatprep.mubr.f32.mxu0 0.0
    %97 = vmatmul.mubr.f32.gmra.mxu0 %v26
    %v98 = vpop.f32.mrf.mxu0
    %v99 = vadd.f32 %v22, %v98
    %v100 = vpop.f32.mrf.mxu0
    %101 = vdwg.mxu0
    %vm102 = vcmask 56320
    %103 = vst.msk [vmem:[#allocation2] sm:$0xff] %vm102, %v99
    // Predicated region
    $region14: #{forward.1} parent=1 // pred_check
      _
    $region15: #{forward.1} parent=1 // pred_check_branch
      %105 = sbr.rel (0) target = $region17
    $region16: #{forward.1} parent=1 // pred_region
      %s107 = ssub.s32 128, 128
      %108 = vsyncadd [#allocation3], %s107
      %s110 = sshll.u32 [#allocation2], 4
      %s111 = int_to_ptr.vmem [resolvable:$true] %s110
      %113 = dma.vmem_to_hbm [thread:$0]  %s111, 128, %s3, [#allocation3]
    $region17: #{forward.1} parent=1 // pred_fallthru
      _
    // Predicated region
    $region18: #{forward.1} parent=1 // pred_check
      _
    $region19: #{forward.1} parent=1 // pred_check_branch
      %115 = sbr.rel (0) target = $region21
    $region20: #{forward.1} parent=1 // pred_region
      %116 = dma.done [#allocation3], 128
    $region21: #{forward.1} parent=1 // pred_fallthru
      _
    %117 = vsyncpa [#allocation3], 1

</llo_original>
